<compile_context>
chip_gen: v6e
topology: v6e:2x2x1
jax: 0.10.0
libtpu: 0.0.40
codegen_flags: <defaults>
</compile_context>

<pallas_src>
import functools

import jax
import jax.numpy as jnp
from jax.experimental import pallas as pl
from jax.experimental.pallas import tpu as pltpu


def _ntxent_kernel(fq_ref, fkt_ref, pm_ref, nm_ref, out_ref,
                   neg_acc, lp_acc, pc_acc, sim_cache, *, n_valid):
    i = pl.program_id(0)        # row tile
    p = pl.program_id(1)        # 0 = similarity + negative-sum sweep, 1 = log-prob sweep
    k = pl.program_id(2)        # column tile
    kt = pl.num_programs(2)

    tq = pm_ref.shape[0]

    # Reset the per-row-tile accumulators at the first (pass, column) step.
    @pl.when((p == 0) & (k == 0))
    def _init():
        neg_acc[...] = jnp.zeros_like(neg_acc)
        lp_acc[...] = jnp.zeros_like(lp_acc)
        pc_acc[...] = jnp.zeros_like(pc_acc)

    @pl.when(p == 0)
    def _sim_and_negative_pass():
        # fq is pre-normalized and pre-scaled by 1/temperature (bf16);
        # fkt is the pre-normalized, pre-transposed (d, tile_k) operand (bf16).
        logits = jnp.dot(fq_ref[...], fkt_ref[...],
                         preferred_element_type=jnp.float32)
        sim = jnp.exp(logits)
        sim_cache[k] = sim                               # cache for pass 1
        nm = nm_ref[...].astype(jnp.float32)             # diag already removed
        neg_acc[...] += jnp.sum(sim * nm, axis=1, keepdims=True)

    @pl.when(p == 1)
    def _logprob_pass():
        sim = sim_cache[k]                               # reuse: no matmul/exp redo
        pm = pm_ref[...].astype(jnp.float32)             # diag already removed
        inv_neg = 1.0 / neg_acc[...]                     # [tq, 1], finalized in pass 0
        log_prob = -jnp.log(sim * inv_neg + 1e-6)        # exact eps semantics
        lp_acc[...] += jnp.sum(log_prob * pm, axis=1, keepdims=True)
        pc_acc[...] += jnp.sum(pm, axis=1, keepdims=True)

    @pl.when((p == 1) & (k == kt - 1))
    def _finalize():
        pos_sums = jnp.where(pc_acc[...] == 0.0, 1.0, pc_acc[...])
        per_row = lp_acc[...] / pos_sums
        row_ids = i * tq + jax.lax.broadcasted_iota(jnp.int32, (tq, 1), 0)
        # Padded rows contribute exactly 0 to the final sum.
        out_ref[...] = jnp.where(row_ids < n_valid, per_row, 0.0)


def _round_up(x, m):
    return ((x + m - 1) // m) * m


def ntxent_loss(features, positive_mask, negative_mask, temperature=0.1):
    """Pallas NTXent forward (non-distributed, accumulate=None path). Scalar loss."""
    features = jnp.asarray(features)
    positive_mask = jnp.asarray(positive_mask)
    negative_mask = jnp.asarray(negative_mask)
    n, d = features.shape
    inv_temp = 1.0 / float(temperature)

    # ---- Wrapper-side preprocessing (fused XLA elementwise passes) ----------
    # Normalize once, fold 1/temperature into the LHS, cast MXU operands to
    # bf16, pre-transpose the RHS to (d, N); fold the diagonal removal into the
    # masks and cast them to bf16 (0/1 masks are exact, halves HBM traffic).
    f = features.astype(jnp.float32)
    norms = jnp.maximum(jnp.linalg.norm(f, axis=1, keepdims=True), 1e-8)
    fn = f / norms
    fq = (fn * inv_temp).astype(jnp.bfloat16)            # (n, d)
    fkt = fn.astype(jnp.bfloat16).T                      # (d, n)

    not_eye = 1.0 - jnp.eye(n, dtype=jnp.float32)
    pm = (positive_mask.astype(jnp.float32) * not_eye).astype(jnp.bfloat16)
    nm = (negative_mask.astype(jnp.float32) * not_eye).astype(jnp.bfloat16)

    # ---- Tiling --------------------------------------------------------------
    if n <= 512:
        n_pad = _round_up(n, 128)
        tile_k = n_pad                                   # single column tile
    else:
        tile_k = 512
        n_pad = _round_up(n, tile_k)
    # >= 2 row tiles whenever possible so both v7x TensorCores get work.
    tile_q = max(min(256, n_pad // 2), 8)
    # Keep the f32 exp(logits) row cache bounded (<= ~16 MiB) for very large N.
    while tile_q > 64 and tile_q * n_pad * 4 > (16 << 20):
        tile_q //= 2
    rt = n_pad // tile_q
    kt = n_pad // tile_k

    if n_pad != n:
        pad = n_pad - n
        fq = jnp.pad(fq, ((0, pad), (0, 0)))
        fkt = jnp.pad(fkt, ((0, 0), (0, pad)))
        pm = jnp.pad(pm, ((0, pad), (0, pad)))
        nm = jnp.pad(nm, ((0, pad), (0, pad)))

    kernel = functools.partial(_ntxent_kernel, n_valid=n)

    # Pass 0 streams nm tiles and fkt tiles; pass 1 streams pm tiles only.  The
    # operands a pass does not need are pinned (via the index_map) to blocks
    # already resident in VMEM, so Pallas skips their DMA.
    fkt_map = lambda i, p, k: (0, k * (1 - p) + (kt - 1) * p)   # pinned in pass 1
    pm_map = lambda i, p, k: (i, k * p)                         # pinned in pass 0
    nm_map = lambda i, p, k: (i, k * (1 - p) + (kt - 1) * p)    # pinned in pass 1

    per_row = pl.pallas_call(
        kernel,
        out_shape=jax.ShapeDtypeStruct((n_pad, 1), jnp.float32),
        grid_spec=pltpu.PrefetchScalarGridSpec(
            num_scalar_prefetch=0,
            grid=(rt, 2, kt),
            in_specs=[
                pl.BlockSpec((tile_q, d), lambda i, p, k: (i, 0)),   # row-tile features (bf16)
                pl.BlockSpec((d, tile_k), fkt_map),                  # transposed col features (bf16)
                pl.BlockSpec((tile_q, tile_k), pm_map),              # positive mask (bf16)
                pl.BlockSpec((tile_q, tile_k), nm_map),              # negative mask (bf16)
            ],
            out_specs=pl.BlockSpec((tile_q, 1), lambda i, p, k: (i, 0)),
            scratch_shapes=[
                pltpu.VMEM((tile_q, 1), jnp.float32),                # neg sum
                pltpu.VMEM((tile_q, 1), jnp.float32),                # log-prob sum
                pltpu.VMEM((tile_q, 1), jnp.float32),                # positive count
                pltpu.VMEM((kt, tile_q, tile_k), jnp.float32),       # exp(logits) row cache
            ],
        ),
        compiler_params=pltpu.CompilerParams(
            dimension_semantics=("parallel", "arbitrary", "arbitrary"),
            vmem_limit_bytes=48 * 1024 * 1024,   # fits v7x's 64 MiB; fine on v5e/v6e
        ),
    )(fq, fkt, pm, nm)

    return jnp.sum(per_row) / n


def _ntxent_ref(features, positive_mask, negative_mask, temperature=0.1):
    """Pure-JAX f32 reference mirroring the PyTorch compute_loss exactly."""
    f = features.astype(jnp.float32)
    n = f.shape[0]
    not_eye = 1.0 - jnp.eye(n, dtype=jnp.float32)
    pm = positive_mask.astype(jnp.float32) * not_eye
    nm = negative_mask.astype(jnp.float32) * not_eye
    pos_sums = jnp.sum(pm, axis=1)
    pos_sums = jnp.where(pos_sums == 0.0, 1.0, pos_sums)
    norms = jnp.maximum(jnp.linalg.norm(f, axis=1, keepdims=True), 1e-8)
    fn = f / norms
    sim = jnp.exp((fn @ fn.T) / temperature)
    neg = jnp.sum(sim * nm, axis=1, keepdims=True)
    log_prob = -jnp.log(sim / neg + 1e-6) * pm
    return jnp.mean(jnp.sum(log_prob, axis=1) / pos_sums)


def _ntxent_ref_bf16(features, positive_mask, negative_mask, temperature=0.1):
    """Reference that matches the kernel's bf16-operand MXU matmul precision."""
    f = features.astype(jnp.float32)
    n = f.shape[0]
    inv_temp = 1.0 / float(temperature)
    norms = jnp.maximum(jnp.linalg.norm(f, axis=1, keepdims=True), 1e-8)
    fn = f / norms
    fq = (fn * inv_temp).astype(jnp.bfloat16)
    fk = fn.astype(jnp.bfloat16)
    logits = jnp.dot(fq, fk.T, preferred_element_type=jnp.float32)
    sim = jnp.exp(logits)
    not_eye = 1.0 - jnp.eye(n, dtype=jnp.float32)
    pm = positive_mask.astype(jnp.float32) * not_eye
    nm = negative_mask.astype(jnp.float32) * not_eye
    pos_sums = jnp.sum(pm, axis=1)
    pos_sums = jnp.where(pos_sums == 0.0, 1.0, pos_sums)
    neg = jnp.sum(sim * nm, axis=1, keepdims=True)
    log_prob = -jnp.log(sim / neg + 1e-6) * pm
    return jnp.mean(jnp.sum(log_prob, axis=1) / pos_sums)


if __name__ == "__main__":
    root = jax.random.PRNGKey(0)

    def make_inputs(key, n, d, views=2):
        feats = jax.random.normal(key, (n, d), dtype=jnp.float32)
        # positive_mask[i, j] = 1 if i and j are views of the same sample.
        sample_id = jnp.arange(n) // views
        pm = (sample_id[:, None] == sample_id[None, :]).astype(jnp.float32)
        nm = 1.0 - pm
        return feats, pm, nm

    # Shapes covering: single-tile, padded, odd-tile, and multi-column-tile paths.
    for n, d in [(8, 32), (200, 64), (300, 64), (520, 64)]:
        root, key = jax.random.split(root)
        feats, pm, nm = make_inputs(key, n, d)
        loss = jax.block_until_ready(ntxent_loss(feats, pm, nm, temperature=0.1))
        ref_bf16 = _ntxent_ref_bf16(feats, pm, nm, temperature=0.1)
        ref_f32 = _ntxent_ref(feats, pm, nm, temperature=0.1)
        assert bool(jnp.isfinite(loss)), (n, d, loss)
        # Tight check against the precision-matched reference (validates kernel logic).
        assert jnp.allclose(loss, ref_bf16, rtol=2e-3, atol=2e-3), (n, d, loss, ref_bf16)
        # Loose check against the full-f32 reference (validates bf16-operand choice).
        assert jnp.allclose(loss, ref_f32, rtol=5e-2, atol=5e-2), (n, d, loss, ref_f32)

    print("KERNEL_OK")
</pallas_src>

<mosaic_0001>
module attributes {stable_mosaic.version = 11 : i64} {
  func.func @_ntxent_kernel(%arg0: i32, %arg1: i32, %arg2: i32, %arg3: memref<64x32xbf16, #tpu.memory_space<vmem>>, %arg4: memref<32x128xbf16, #tpu.memory_space<vmem>>, %arg5: memref<64x128xbf16, #tpu.memory_space<vmem>>, %arg6: memref<64x128xbf16, #tpu.memory_space<vmem>>, %arg7: memref<64x1xf32, #tpu.memory_space<vmem>>, %arg8: memref<64x1xf32, #tpu.memory_space<vmem>>, %arg9: memref<64x1xf32, #tpu.memory_space<vmem>>, %arg10: memref<64x1xf32, #tpu.memory_space<vmem>>, %arg11: memref<1x64x128xf32, #tpu.memory_space<vmem>>) attributes {dimension_semantics = [#tpu.dimension_semantics<parallel>, #tpu.dimension_semantics<arbitrary>, #tpu.dimension_semantics<arbitrary>], iteration_bounds = array<i64: 2, 2, 1>, scalar_prefetch = 0 : i64, scratch_operands = 4 : i64, tpu.core_type = #tpu.core_type<tc>, window_params = [{transform_indices = @transform_0, window_bounds = array<i64: 64, 32>}, {transform_indices = @transform_1, window_bounds = array<i64: 32, 128>}, {transform_indices = @transform_2, window_bounds = array<i64: 64, 128>}, {transform_indices = @transform_3, window_bounds = array<i64: 64, 128>}, {transform_indices = @transform_4, window_bounds = array<i64: 64, 1>}]} {
    %c0_i32 = arith.constant 0 : i32
    %0 = arith.cmpi eq, %arg1, %c0_i32 : i32
    %c0_i32_0 = arith.constant 0 : i32
    %1 = arith.cmpi eq, %arg2, %c0_i32_0 : i32
    %2 = arith.andi %0, %1 : i1
    %3 = arith.extui %2 : i1 to i32
    %c0_i32_1 = arith.constant 0 : i32
    %4 = arith.cmpi ne, %3, %c0_i32_1 : i32
    scf.if %4 {
      %cst = arith.constant 0.000000e+00 : f32
      %16 = vector.broadcast %cst : f32 to vector<64x1xf32>
      %c0 = arith.constant 0 : index
      %c0_8 = arith.constant 0 : index
      %17 = vector.load %arg8[%c0, %c0_8] : memref<64x1xf32, #tpu.memory_space<vmem>>, vector<64x1xf32>
      tpu.vector_store %arg8[%c0, %c0_8], %16 {strides = array<i32>} : memref<64x1xf32, #tpu.memory_space<vmem>>, vector<64x1xf32>,
      %cst_9 = arith.constant 0.000000e+00 : f32
      %18 = vector.broadcast %cst_9 : f32 to vector<64x1xf32>
      %c0_10 = arith.constant 0 : index
      %c0_11 = arith.constant 0 : index
      %19 = vector.load %arg9[%c0_10, %c0_11] : memref<64x1xf32, #tpu.memory_space<vmem>>, vector<64x1xf32>
      tpu.vector_store %arg9[%c0_10, %c0_11], %18 {strides = array<i32>} : memref<64x1xf32, #tpu.memory_space<vmem>>, vector<64x1xf32>,
      %cst_12 = arith.constant 0.000000e+00 : f32
      %20 = vector.broadcast %cst_12 : f32 to vector<64x1xf32>
      %c0_13 = arith.constant 0 : index
      %c0_14 = arith.constant 0 : index
      %21 = vector.load %arg10[%c0_13, %c0_14] : memref<64x1xf32, #tpu.memory_space<vmem>>, vector<64x1xf32>
      tpu.vector_store %arg10[%c0_13, %c0_14], %20 {strides = array<i32>} : memref<64x1xf32, #tpu.memory_space<vmem>>, vector<64x1xf32>,
    } else {
    }
    %c0_i32_2 = arith.constant 0 : i32
    %5 = arith.cmpi eq, %arg1, %c0_i32_2 : i32
    %6 = arith.extui %5 : i1 to i32
    %c0_i32_3 = arith.constant 0 : i32
    %7 = arith.cmpi ne, %6, %c0_i32_3 : i32
    scf.if %7 {
      %c0 = arith.constant 0 : index
      %c0_8 = arith.constant 0 : index
      %16 = vector.load %arg3[%c0, %c0_8] : memref<64x32xbf16, #tpu.memory_space<vmem>>, vector<64x32xbf16>
      %c0_9 = arith.constant 0 : index
      %c0_10 = arith.constant 0 : index
      %17 = vector.load %arg4[%c0_9, %c0_10] : memref<32x128xbf16, #tpu.memory_space<vmem>>, vector<32x128xbf16>
      %cst = arith.constant dense<0.000000e+00> : vector<64x128xf32>
      %18 = tpu.matmul %16, %17, %cst {dimension_numbers = #tpu.dot_dimension_numbers<[1], [0], [0], [1], [0, 0, 1, 1], [], []>} : vector<64x32xbf16>, vector<32x128xbf16>, vector<64x128xf32> -> vector<64x128xf32>
      %19 = math.exp %18 : vector<64x128xf32>
      %20 = arith.index_cast %arg2 : i32 to index
      %c0_11 = arith.constant 0 : index
      %c0_12 = arith.constant 0 : index
      %21 = vector.load %arg11[%20, %c0_11, %c0_12] : memref<1x64x128xf32, #tpu.memory_space<vmem>>, vector<1x64x128xf32>
      %22 = vector.shape_cast %21 : vector<1x64x128xf32> to vector<64x128xf32>
      %23 = vector.shape_cast %19 : vector<64x128xf32> to vector<1x64x128xf32>
      tpu.vector_store %arg11[%20, %c0_11, %c0_12], %23 {strides = array<i32>} : memref<1x64x128xf32, #tpu.memory_space<vmem>>, vector<1x64x128xf32>,
      %c0_13 = arith.constant 0 : index
      %c0_14 = arith.constant 0 : index
      %24 = vector.load %arg6[%c0_13, %c0_14] : memref<64x128xbf16, #tpu.memory_space<vmem>>, vector<64x128xbf16>
      %25 = arith.extf %24 : vector<64x128xbf16> to vector<64x128xf32>
      %c0_15 = arith.constant 0 : index
      %c0_16 = arith.constant 0 : index
      %26 = vector.load %arg8[%c0_15, %c0_16] : memref<64x1xf32, #tpu.memory_space<vmem>>, vector<64x1xf32>
      %27 = arith.mulf %19, %25 : vector<64x128xf32>
      %cst_17 = arith.constant dense<0.000000e+00> : vector<64xf32>
      %28 = vector.multi_reduction <add>, %27, %cst_17 [1] : vector<64x128xf32> to vector<64xf32>
      %29 = vector.shape_cast %28 : vector<64xf32> to vector<64x1xf32>
      %30 = arith.addf %26, %29 : vector<64x1xf32>
      %c0_18 = arith.constant 0 : index
      %c0_19 = arith.constant 0 : index
      %31 = vector.load %arg8[%c0_18, %c0_19] : memref<64x1xf32, #tpu.memory_space<vmem>>, vector<64x1xf32>
      tpu.vector_store %arg8[%c0_18, %c0_19], %30 {strides = array<i32>} : memref<64x1xf32, #tpu.memory_space<vmem>>, vector<64x1xf32>,
    } else {
    }
    %c1_i32 = arith.constant 1 : i32
    %8 = arith.cmpi eq, %arg1, %c1_i32 : i32
    %9 = arith.extui %8 : i1 to i32
    %c0_i32_4 = arith.constant 0 : i32
    %10 = arith.cmpi ne, %9, %c0_i32_4 : i32
    scf.if %10 {
      %16 = arith.index_cast %arg2 : i32 to index
      %c0 = arith.constant 0 : index
      %c0_8 = arith.constant 0 : index
      %17 = vector.load %arg11[%16, %c0, %c0_8] : memref<1x64x128xf32, #tpu.memory_space<vmem>>, vector<1x64x128xf32>
      %18 = vector.shape_cast %17 : vector<1x64x128xf32> to vector<64x128xf32>
      %c0_9 = arith.constant 0 : index
      %c0_10 = arith.constant 0 : index
      %19 = vector.load %arg5[%c0_9, %c0_10] : memref<64x128xbf16, #tpu.memory_space<vmem>>, vector<64x128xbf16>
      %20 = arith.extf %19 : vector<64x128xbf16> to vector<64x128xf32>
      %c0_11 = arith.constant 0 : index
      %c0_12 = arith.constant 0 : index
      %21 = vector.load %arg8[%c0_11, %c0_12] : memref<64x1xf32, #tpu.memory_space<vmem>>, vector<64x1xf32>
      %cst = arith.constant 1.000000e+00 : f32
      %22 = vector.broadcast %cst : f32 to vector<64x1xf32>
      %23 = arith.divf %22, %21 : vector<64x1xf32>
      %24 = vector.broadcast %23 : vector<64x1xf32> to vector<64x128xf32>
      %25 = arith.mulf %18, %24 : vector<64x128xf32>
      %cst_13 = arith.constant 9.99999997E-7 : f32
      %26 = vector.broadcast %cst_13 : f32 to vector<64x128xf32>
      %27 = arith.addf %25, %26 : vector<64x128xf32>
      %28 = math.log %27 : vector<64x128xf32>
      %cst_14 = arith.constant 0.000000e+00 : f32
      %29 = vector.broadcast %cst_14 : f32 to vector<64x128xf32>
      %30 = arith.subf %29, %28 : vector<64x128xf32>
      %c0_15 = arith.constant 0 : index
      %c0_16 = arith.constant 0 : index
      %31 = vector.load %arg9[%c0_15, %c0_16] : memref<64x1xf32, #tpu.memory_space<vmem>>, vector<64x1xf32>
      %32 = arith.mulf %30, %20 : vector<64x128xf32>
      %cst_17 = arith.constant dense<0.000000e+00> : vector<64xf32>
      %33 = vector.multi_reduction <add>, %32, %cst_17 [1] : vector<64x128xf32> to vector<64xf32>
      %34 = vector.shape_cast %33 : vector<64xf32> to vector<64x1xf32>
      %35 = arith.addf %31, %34 : vector<64x1xf32>
      %c0_18 = arith.constant 0 : index
      %c0_19 = arith.constant 0 : index
      %36 = vector.load %arg9[%c0_18, %c0_19] : memref<64x1xf32, #tpu.memory_space<vmem>>, vector<64x1xf32>
      tpu.vector_store %arg9[%c0_18, %c0_19], %35 {strides = array<i32>} : memref<64x1xf32, #tpu.memory_space<vmem>>, vector<64x1xf32>,
      %c0_20 = arith.constant 0 : index
      %c0_21 = arith.constant 0 : index
      %37 = vector.load %arg10[%c0_20, %c0_21] : memref<64x1xf32, #tpu.memory_space<vmem>>, vector<64x1xf32>
      %cst_22 = arith.constant dense<0.000000e+00> : vector<64xf32>
      %38 = vector.multi_reduction <add>, %20, %cst_22 [1] : vector<64x128xf32> to vector<64xf32>
      %39 = vector.shape_cast %38 : vector<64xf32> to vector<64x1xf32>
      %40 = arith.addf %37, %39 : vector<64x1xf32>
      %c0_23 = arith.constant 0 : index
      %c0_24 = arith.constant 0 : index
      %41 = vector.load %arg10[%c0_23, %c0_24] : memref<64x1xf32, #tpu.memory_space<vmem>>, vector<64x1xf32>
      tpu.vector_store %arg10[%c0_23, %c0_24], %40 {strides = array<i32>} : memref<64x1xf32, #tpu.memory_space<vmem>>, vector<64x1xf32>,
    } else {
    }
    %c1_i32_5 = arith.constant 1 : i32
    %11 = arith.cmpi eq, %arg1, %c1_i32_5 : i32
    %c0_i32_6 = arith.constant 0 : i32
    %12 = arith.cmpi eq, %arg2, %c0_i32_6 : i32
    %13 = arith.andi %11, %12 : i1
    %14 = arith.extui %13 : i1 to i32
    %c0_i32_7 = arith.constant 0 : i32
    %15 = arith.cmpi ne, %14, %c0_i32_7 : i32
    scf.if %15 {
      %c0 = arith.constant 0 : index
      %c0_8 = arith.constant 0 : index
      %16 = vector.load %arg10[%c0, %c0_8] : memref<64x1xf32, #tpu.memory_space<vmem>>, vector<64x1xf32>
      %cst = arith.constant 0.000000e+00 : f32
      %17 = vector.broadcast %cst : f32 to vector<64x1xf32>
      %18 = arith.cmpf oeq, %16, %17 : vector<64x1xf32>
      %c0_9 = arith.constant 0 : index
      %c0_10 = arith.constant 0 : index
      %19 = vector.load %arg10[%c0_9, %c0_10] : memref<64x1xf32, #tpu.memory_space<vmem>>, vector<64x1xf32>
      %cst_11 = arith.constant 1.000000e+00 : f32
      %20 = vector.broadcast %cst_11 : f32 to vector<64x1xf32>
      %21 = arith.select %18, %20, %19 : vector<64x1xi1>, vector<64x1xf32>
      %c0_12 = arith.constant 0 : index
      %c0_13 = arith.constant 0 : index
      %22 = vector.load %arg9[%c0_12, %c0_13] : memref<64x1xf32, #tpu.memory_space<vmem>>, vector<64x1xf32>
      %23 = arith.divf %22, %21 : vector<64x1xf32>
      %c64_i32 = arith.constant 64 : i32
      %24 = arith.muli %arg0, %c64_i32 : i32
      %25 = tpu.iota {dimensions = array<i32: 0>} : vector<64x1xi32>
      %26 = vector.broadcast %24 : i32 to vector<64x1xi32>
      %27 = arith.addi %26, %25 : vector<64x1xi32>
      %c8_i32 = arith.constant 8 : i32
      %28 = vector.broadcast %c8_i32 : i32 to vector<64x1xi32>
      %29 = arith.cmpi slt, %27, %28 : vector<64x1xi32>
      %cst_14 = arith.constant 0.000000e+00 : f32
      %30 = vector.broadcast %cst_14 : f32 to vector<64x1xf32>
      %31 = arith.select %29, %23, %30 : vector<64x1xi1>, vector<64x1xf32>
      %c0_15 = arith.constant 0 : index
      %c0_16 = arith.constant 0 : index
      %32 = vector.load %arg7[%c0_15, %c0_16] : memref<64x1xf32, #tpu.memory_space<vmem>>, vector<64x1xf32>
      tpu.vector_store %arg7[%c0_15, %c0_16], %31 {strides = array<i32>} : memref<64x1xf32, #tpu.memory_space<vmem>>, vector<64x1xf32>,
    } else {
    }
    return
  }
  func.func @transform_0(%arg0: i32, %arg1: i32, %arg2: i32) -> (i32, i32) {
    %c0_i32 = arith.constant 0 : i32
    %c0_i32_0 = arith.constant 0 : i32
    return %arg0, %c0_i32 : i32, i32
  }
  func.func @transform_1(%arg0: i32, %arg1: i32, %arg2: i32) -> (i32, i32) {
    %c1_i32 = arith.constant 1 : i32
    %0 = arith.subi %c1_i32, %arg1 : i32
    %1 = arith.muli %arg2, %0 : i32
    %c0_i32 = arith.constant 0 : i32
    %2 = arith.muli %c0_i32, %arg1 : i32
    %3 = arith.addi %1, %2 : i32
    %c0_i32_0 = arith.constant 0 : i32
    %c0_i32_1 = arith.constant 0 : i32
    return %c0_i32_0, %3 : i32, i32
  }
  func.func @transform_2(%arg0: i32, %arg1: i32, %arg2: i32) -> (i32, i32) {
    %0 = arith.muli %arg2, %arg1 : i32
    %c0_i32 = arith.constant 0 : i32
    return %arg0, %0 : i32, i32
  }
  func.func @transform_3(%arg0: i32, %arg1: i32, %arg2: i32) -> (i32, i32) {
    %c1_i32 = arith.constant 1 : i32
    %0 = arith.subi %c1_i32, %arg1 : i32
    %1 = arith.muli %arg2, %0 : i32
    %c0_i32 = arith.constant 0 : i32
    %2 = arith.muli %c0_i32, %arg1 : i32
    %3 = arith.addi %1, %2 : i32
    %c0_i32_0 = arith.constant 0 : i32
    return %arg0, %3 : i32, i32
  }
  func.func @transform_4(%arg0: i32, %arg1: i32, %arg2: i32) -> (i32, i32) {
    %c0_i32 = arith.constant 0 : i32
    %c0_i32_0 = arith.constant 0 : i32
    return %arg0, %c0_i32 : i32, i32
  }
}

</mosaic_0001>

<llo_original>
// kernel: tpu_custom_call.1
$region0: #{tpu_custom_call.1}
  #allocation0 [shape = 'u32[]', space=smem, size = 0x4, offset = 0x4, fixed_abs, tag = 'smem constant byte address 0x4 - core index']
  #allocation1 [shape = 'u32[144,128]{1,0:T(1,128)}', space=vmem, size = 0x12000, scoped, tag = 'internal scratch']
  #allocation2 [shape = 'f32[64,1]{1,0:T(8,128)}', space=vmem, size = 0x8000, scoped, tag = 'scratch operand']
  #allocation3 [shape = 'f32[64,1]{1,0:T(8,128)}', space=vmem, size = 0x8000, scoped, tag = 'scratch operand']
  #allocation4 [shape = 'f32[64,1]{1,0:T(8,128)}', space=vmem, size = 0x8000, scoped, tag = 'scratch operand']
  #allocation5 [shape = 'f32[1,64,128]{2,1,0:T(8,128)}', space=vmem, size = 0x8000, scoped, tag = 'scratch operand']
  %s0 = inlined_call_operand.vmem [shape: bf16[128,32], index: 0, kind: input, shape index: {}]
  %s1 = inlined_call_operand.vmem [shape: bf16[32,128], index: 1, kind: input, shape index: {}]
  %s2 = inlined_call_operand.vmem [shape: bf16[128,128], index: 2, kind: input, shape index: {}]
  %s3 = inlined_call_operand.hbm [shape: bf16[128,128], index: 3, kind: input, shape index: {}]
  %s4 = inlined_call_operand.vmem [shape: f32[128,1], index: 4, kind: output, shape index: {}]
  %s5 = sld [smem:[#allocation0]]
  $region69: #{tpu_custom_call.1} parent=0
    _
  %s7 = ssub.s32 1, %s5
  %s8 = scalar_select 0, %s7, %s5
  $region1: #{tpu_custom_call.1} parent=0
    #allocation6 [shape = 'u8[32768]{0}', space=vmem, size = 0x8000, scoped, tag = 'input window, operand 3']
    #allocation7 [shape = 's32[2]{0}', space=sflag, size = 0x8, scoped, tag = 'scoped memory for tpu_custom_call.1']
    %9 = vsyncpa [#allocation7], 0
    %s10 = scalar_lea.sflag [#allocation7], 1
    %11 = vsyncpa %s10, 0
    loop: start=0, step=1, limit=6
    $region2: #{tpu_custom_call.1} parent=1 // loop_pre_header
      _
    $region3: #{tpu_custom_call.1} parent=1 // loop_header
      %s13 = sphi 0, %s17
      %p14 = scmp.ge.s32.totalorder %s13, 6
      %s20 = sphi 0, %s39
      %s21 = sphi 0, %s35
      %s22 = sphi 0, %s31
      %s23 = sphi 0, %s20
      %s24 = sphi 0, %s21
      %s25 = sphi 0, %s22
      %s26 = sphi 0, %s23
      %s27 = sphi 0, %s24
      %s28 = sphi 0, %s25
      %s42 = sphi 0, %s44
      %s45 = sphi 0, %s42
      %s46 = sphi 0, %s45
      %s62 = sphi 0, %s46
      %s72 = sphi 0, %s74
      %s75 = sphi 0, %s72
      %s76 = sphi 0, %s75
      %s92 = sphi 0, %s76
      %s102 = sphi 0, %s104
      %s105 = sphi 0, %s102
      %s106 = sphi 0, %s105
      %s122 = sphi 0, %s106
      %s134 = sphi 0, %s136
      %s137 = sphi 0, %s134
      %s138 = sphi 0, %s137
      %s154 = sphi 0, %s138
      %s160 = sphi 0, %s162
      %s163 = sphi 0, %s160
      %s164 = sphi 0, %s163
      %s180 = sphi 0, %s164
    $region4: #{tpu_custom_call.1} parent=1 // loop_header_branch
      %16 = sbr.rel (%p14) target = $region8
    $region5: #{tpu_custom_call.1} parent=1 // loop_body
      %s18 = ssub.s32 %s13, 1
      %s19 = ssub.s32 %s13, 2
      %s29 = sadd.s32 1, %s22
      %p30 = scmp.ge.s32.totalorder %s29, 1
      %s31 = scalar_select %p30, 0, %s29
      %s32 = sadd.s32 1, %s21
      %s33 = scalar_select %p30, %s32, %s21
      %p34 = scmp.ge.s32.totalorder %s33, 2
      %s35 = scalar_select %p34, 0, %s33
      %s36 = sadd.s32 1, %s20
      %s37 = scalar_select %p34, %s36, %s20
      %p38 = scmp.ge.s32.totalorder %s37, 2
      %s39 = scalar_select %p38, 0, %s37
      %s40 = ssub.s32 %s20, %s39
      %p41 = scmp.eq.s32.totalorder %s40, 0
      %s43 = sadd.s32 %s42, 1
      %s44 = scalar_select %p41, %s42, %s43
      %p47 = pneg %p41
      %p48 = scmp.eq.s32.totalorder %s13, 3
      %p49 = por %p47, %p48
      %p50 = scmp.ne.s32.totalorder %s42, %s45
      %p51 = scmp.eq.s32.totalorder %s13, 0
      %p52 = por %p50, %p51
      %p53 = scmp.ne.s32.totalorder %s42, %s45
      %p54 = scmp.eq.s32.totalorder %s18, 3
      %p55 = por %p53, %p54
      %p56 = scmp.ne.s32.totalorder %s45, %s46
      %p57 = scmp.eq.s32.totalorder %s18, 0
      %p58 = por %p56, %p57
      %p59 = scmp.ne.s32.totalorder %s45, %s46
      %p60 = scmp.eq.s32.totalorder %s19, 3
      %p61 = por %p59, %p60
      %p63 = scmp.ne.s32.totalorder %s46, %s62
      %p64 = scmp.eq.s32.totalorder %s19, 0
      %p65 = por %p63, %p64
      %s66 = ssub.s32 1, %s21
      %s67 = smul.u32 %s22, %s66
      %s68 = ssub.s32 1, %s35
      %s69 = smul.u32 %s31, %s68
      %s70 = ssub.s32 %s67, %s69
      %p71 = scmp.eq.s32.totalorder %s70, 0
      %s73 = sadd.s32 %s72, 1
      %s74 = scalar_select %p71, %s72, %s73
      %p77 = pneg %p71
      %p78 = scmp.eq.s32.totalorder %s13, 3
      %p79 = por %p77, %p78
      %p80 = scmp.ne.s32.totalorder %s72, %s75
      %p81 = scmp.eq.s32.totalorder %s13, 0
      %p82 = por %p80, %p81
      %p83 = scmp.ne.s32.totalorder %s72, %s75
      %p84 = scmp.eq.s32.totalorder %s18, 3
      %p85 = por %p83, %p84
      %p86 = scmp.ne.s32.totalorder %s75, %s76
      %p87 = scmp.eq.s32.totalorder %s18, 0
      %p88 = por %p86, %p87
      %p89 = scmp.ne.s32.totalorder %s75, %s76
      %p90 = scmp.eq.s32.totalorder %s19, 3
      %p91 = por %p89, %p90
      %p93 = scmp.ne.s32.totalorder %s76, %s92
      %p94 = scmp.eq.s32.totalorder %s19, 0
      %p95 = por %p93, %p94
      %s96 = smul.u32 %s22, %s21
      %s97 = smul.u32 %s31, %s35
      %s98 = ssub.s32 %s20, %s39
      %s99 = ssub.s32 %s96, %s97
      %s100 = sor.u32 %s98, %s99
      %p101 = scmp.eq.s32.totalorder %s100, 0
      %s103 = sadd.s32 %s102, 1
      %s104 = scalar_select %p101, %s102, %s103
      %p107 = pneg %p101
      %p108 = scmp.eq.s32.totalorder %s13, 3
      %p109 = por %p107, %p108
      %p110 = scmp.ne.s32.totalorder %s102, %s105
      %p111 = scmp.eq.s32.totalorder %s13, 0
      %p112 = por %p110, %p111
      %p113 = scmp.ne.s32.totalorder %s102, %s105
      %p114 = scmp.eq.s32.totalorder %s18, 3
      %p115 = por %p113, %p114
      %p116 = scmp.ne.s32.totalorder %s105, %s106
      %p117 = scmp.eq.s32.totalorder %s18, 0
      %p118 = por %p116, %p117
      %p119 = scmp.ne.s32.totalorder %s105, %s106
      %p120 = scmp.eq.s32.totalorder %s19, 3
      %p121 = por %p119, %p120
      %p123 = scmp.ne.s32.totalorder %s106, %s122
      %p124 = scmp.eq.s32.totalorder %s19, 0
      %p125 = por %p123, %p124
      %s126 = ssub.s32 1, %s21
      %s127 = smul.u32 %s22, %s126
      %s128 = ssub.s32 1, %s35
      %s129 = smul.u32 %s31, %s128
      %s130 = ssub.s32 %s20, %s39
      %s131 = ssub.s32 %s127, %s129
      %s132 = sor.u32 %s130, %s131
      %p133 = scmp.eq.s32.totalorder %s132, 0
      %s135 = sadd.s32 %s134, 1
      %s136 = scalar_select %p133, %s134, %s135
      %p139 = pneg %p133
      %p140 = scmp.eq.s32.totalorder %s13, 3
      %p141 = por %p139, %p140
      %p142 = scmp.ne.s32.totalorder %s134, %s137
      %p143 = scmp.eq.s32.totalorder %s13, 0
      %p144 = por %p142, %p143
      %p145 = scmp.ne.s32.totalorder %s134, %s137
      %p146 = scmp.eq.s32.totalorder %s18, 3
      %p147 = por %p145, %p146
      %p148 = scmp.ne.s32.totalorder %s137, %s138
      %p149 = scmp.eq.s32.totalorder %s18, 0
      %p150 = por %p148, %p149
      %p151 = scmp.ne.s32.totalorder %s137, %s138
      %p152 = scmp.eq.s32.totalorder %s19, 3
      %p153 = por %p151, %p152
      %p155 = scmp.ne.s32.totalorder %s138, %s154
      %p156 = scmp.eq.s32.totalorder %s19, 0
      %p157 = por %p155, %p156
      %s158 = ssub.s32 %s20, %s39
      %p159 = scmp.eq.s32.totalorder %s158, 0
      %s161 = sadd.s32 %s160, 1
      %s162 = scalar_select %p159, %s160, %s161
      %p165 = pneg %p159
      %p166 = scmp.eq.s32.totalorder %s13, 3
      %p167 = por %p165, %p166
      %p168 = scmp.ne.s32.totalorder %s160, %s163
      %p169 = scmp.eq.s32.totalorder %s13, 0
      %p170 = por %p168, %p169
      %p171 = scmp.ne.s32.totalorder %s160, %s163
      %p172 = scmp.eq.s32.totalorder %s18, 3
      %p173 = por %p171, %p172
      %p174 = scmp.ne.s32.totalorder %s163, %s164
      %p175 = scmp.eq.s32.totalorder %s18, 0
      %p176 = por %p174, %p175
      %p177 = scmp.ne.s32.totalorder %s163, %s164
      %p178 = scmp.eq.s32.totalorder %s19, 3
      %p179 = por %p177, %p178
      %p181 = scmp.ne.s32.totalorder %s164, %s180
      %p182 = scmp.eq.s32.totalorder %s19, 0
      %p183 = por %p181, %p182
      %p184 = scmp.le.s32.totalorder 1, %s13
      %p185 = scmp.lt.s32.totalorder %s13, 5
      %p186 = pnand %p184, %p185
      %p187 = pneg %p186
      // Predicated region
      $region9: #{tpu_custom_call.1} parent=5 // pred_check
        _
      $region10: #{tpu_custom_call.1} parent=5 // pred_check_branch
        %189 = sbr.rel (%p186) target = $region12
      $region11: #{tpu_custom_call.1} parent=5 // pred_region
        %s190 = ssub.s32 %s13, 1
      $region12: #{tpu_custom_call.1} parent=5 // pred_fallthru
        _
      %p191 = scmp.lt.s32.totalorder %s13, 4
      // Predicated region
      $region13: #{tpu_custom_call.1} parent=5 // pred_check
        %p192 = pneg %p191
      $region14: #{tpu_custom_call.1} parent=5 // pred_check_branch
        %194 = sbr.rel (%p192) target = $region16
      $region15: #{tpu_custom_call.1} parent=5 // pred_region
        // Predicated region
        $region17: #{tpu_custom_call.1} parent=15 // pred_check
          %p195 = pneg %p52
        $region18: #{tpu_custom_call.1} parent=15 // pred_check_branch
          %197 = sbr.rel (%p195) target = $region20
        $region19: #{tpu_custom_call.1} parent=15 // pred_region
          %s198 = smul.u32 8, %s20
          %p199 = scmp.lt.s32.totalorder %s198, 15
          %s200 = scalar_select %p199, %s198, 15
          %s201 = smul.addr %s200, 4
          %s202 = scalar_lea.vmem %s0, %s201
          %s203 = smul.u32 8, %s20
        $region20: #{tpu_custom_call.1} parent=15 // pred_fallthru
          _
        // Predicated region
        $region21: #{tpu_custom_call.1} parent=15 // pred_check
          %p204 = pneg %p82
        $region22: #{tpu_custom_call.1} parent=15 // pred_check_branch
          %206 = sbr.rel (%p204) target = $region24
        $region23: #{tpu_custom_call.1} parent=15 // pred_region
          %s207 = ssub.s32 1, %s21
          %s208 = smul.u32 %s22, %s207
          %p209 = scmp.lt.s32.totalorder %s208, 0
          %s210 = scalar_select %p209, %s208, 0
          %s211 = smul.addr %s210, 4
          %s212 = scalar_lea.vmem %s1, %s211
          %s213 = ssub.s32 1, %s21
          %s214 = smul.u32 %s22, %s213
        $region24: #{tpu_custom_call.1} parent=15 // pred_fallthru
          _
        // Predicated region
        $region25: #{tpu_custom_call.1} parent=15 // pred_check
          %p215 = pneg %p112
        $region26: #{tpu_custom_call.1} parent=15 // pred_check_branch
          %217 = sbr.rel (%p215) target = $region28
        $region27: #{tpu_custom_call.1} parent=15 // pred_region
          %s218 = smul.u32 %s22, %s21
          %s219 = smul.u32 8, %s20
          %p220 = scmp.lt.s32.totalorder %s219, 15
          %s221 = scalar_select %p220, %s219, 15
          %p222 = scmp.lt.s32.totalorder %s218, 0
          %s223 = scalar_select %p222, %s218, 0
          %s224 = sadd.s32 %s223, %s221
          %s225 = smul.addr %s224, 4
          %s226 = scalar_lea.vmem %s2, %s225
          %s227 = smul.u32 %s22, %s21
          %s228 = smul.u32 8, %s20
        $region28: #{tpu_custom_call.1} parent=15 // pred_fallthru
          _
        // Predicated region
        $region29: #{tpu_custom_call.1} parent=15 // pred_check
          %p229 = pneg %p144
        $region30: #{tpu_custom_call.1} parent=15 // pred_check_branch
          %231 = sbr.rel (%p229) target = $region32
        $region31: #{tpu_custom_call.1} parent=15 // pred_region
          %s232 = sand.u32 %s134, 1
          %s233 = scalar_lea.sflag [#allocation7], %s232
          %s234 = sand.u32 %s134, 1
          %s235 = smul.addr %s234, 32
          %s236 = scalar_lea.vmem [#allocation6], %s235
          %s237 = ssub.s32 1, %s21
          %s238 = smul.u32 %s22, %s237
          %s239 = smul.u32 8, %s20
          %s241 = ssub.s32 512, 512
          %242 = vsyncadd %s233, %s241
          %s243 = sadd.s32 %s238, %s239
          %s244 = smul.addr %s243, 64
          %s245 = scalar_lea.hbm %s3, %s244
          %s246 = sshll.u32 %s236, 4
          %s247 = int_to_ptr.vmem [resolvable:$true] %s246
          %252 = dma.hbm_to_vmem [thread:$0]  %s245, 512, %s247, %s233, 64, 64, 4
        $region32: #{tpu_custom_call.1} parent=15 // pred_fallthru
          _
      $region16: #{tpu_custom_call.1} parent=5 // pred_fallthru
        _
      %p253 = scmp.le.s32.totalorder 1, %s13
      %p254 = scmp.lt.s32.totalorder %s13, 5
      %p255 = pnand %p253, %p254
      %p256 = pneg %p255
      // Predicated region
      $region33: #{tpu_custom_call.1} parent=5 // pred_check
        _
      $region34: #{tpu_custom_call.1} parent=5 // pred_check_branch
        %258 = sbr.rel (%p255) target = $region36
      $region35: #{tpu_custom_call.1} parent=5 // pred_region
        %s259 = ssub.s32 %s13, 1
        %s260 = sand.u32 %s137, 1
        %s261 = scalar_lea.sflag [#allocation7], %s260
        %s262 = sand.u32 %s137, 1
        %s263 = smul.addr %s262, 32
        %s264 = scalar_lea.vmem [#allocation6], %s263
        // Predicated region
        $region37: #{tpu_custom_call.1} parent=35 // pred_check
          %p265 = pneg %p150
        $region38: #{tpu_custom_call.1} parent=35 // pred_check_branch
          %267 = sbr.rel (%p265) target = $region40
        $region39: #{tpu_custom_call.1} parent=35 // pred_region
          %268 = dma.done %s261, 512
        $region40: #{tpu_custom_call.1} parent=35 // pred_fallthru
          _
        %s269 = smul.u32 8, %s23
        %p270 = scmp.lt.s32.totalorder %s269, 15
        %s271 = scalar_select %p270, %s269, 15
        %s272 = smul.addr %s271, 4
        %s273 = scalar_lea.vmem %s0, %s272
        %p274 = pneg %p58
        %p275 = pneg %p55
        %s276 = ssub.s32 1, %s24
        %s277 = smul.u32 %s25, %s276
        %p278 = scmp.lt.s32.totalorder %s277, 0
        %s279 = scalar_select %p278, %s277, 0
        %s280 = smul.addr %s279, 4
        %s281 = scalar_lea.vmem %s1, %s280
        %p282 = pneg %p88
        %p283 = pneg %p85
        %s284 = smul.u32 %s25, %s24
        %s285 = smul.u32 8, %s23
        %p286 = scmp.lt.s32.totalorder %s285, 15
        %s287 = scalar_select %p286, %s285, 15
        %p288 = scmp.lt.s32.totalorder %s284, 0
        %s289 = scalar_select %p288, %s284, 0
        %s290 = sadd.s32 %s289, %s287
        %s291 = smul.addr %s290, 4
        %s292 = scalar_lea.vmem %s2, %s291
        %p293 = pneg %p118
        %p294 = pneg %p115
        %s295 = sand.u32 %s137, 1
        %s296 = scalar_lea.sflag [#allocation7], %s295
        %s297 = sand.u32 %s137, 1
        %s298 = smul.addr %s297, 32
        %s299 = scalar_lea.vmem [#allocation6], %s298
        %p300 = pneg %p150
        %p301 = pneg %p147
        %p302 = pneg %p176
        %p303 = pneg %p173
        %s304 = smul.u32 8, %s23
        %p305 = scmp.lt.s32.totalorder %s304, 15
        %s306 = scalar_select %p305, %s304, 15
        %s307 = smul.addr %s306, 8
        %s308 = scalar_lea.vmem %s4, %s307
        %s309 = smul.u32 8, %s23
        %p310 = scmp.lt.s32.totalorder %s309, 15
        %s311 = scalar_select %p310, %s309, 15
        %s312 = smul.addr %s311, 4
        %s313 = scalar_lea.vmem %s0, %s312
        %s314 = smul.u32 8, %s23
        %s315 = ssub.s32 1, %s24
        %s316 = smul.u32 %s25, %s315
        %p317 = scmp.lt.s32.totalorder %s316, 0
        %s318 = scalar_select %p317, %s316, 0
        %s319 = smul.addr %s318, 4
        %s320 = scalar_lea.vmem %s1, %s319
        %s321 = ssub.s32 1, %s24
        %s322 = smul.u32 %s25, %s321
        %s323 = smul.u32 %s25, %s24
        %s324 = smul.u32 8, %s23
        %p325 = scmp.lt.s32.totalorder %s324, 15
        %s326 = scalar_select %p325, %s324, 15
        %p327 = scmp.lt.s32.totalorder %s323, 0
        %s328 = scalar_select %p327, %s323, 0
        %s329 = sadd.s32 %s328, %s326
        %s330 = smul.addr %s329, 4
        %s331 = scalar_lea.vmem %s2, %s330
        %s332 = smul.u32 %s25, %s24
        %s333 = smul.u32 8, %s23
        %s334 = ssub.s32 1, %s24
        %s335 = smul.u32 %s25, %s334
        %s336 = smul.u32 8, %s23
        %s337 = smul.u32 8, %s23
        %p338 = scmp.lt.s32.totalorder %s337, 15
        %s339 = scalar_select %p338, %s337, 15
        %s340 = smul.addr %s339, 8
        %s341 = scalar_lea.vmem %s4, %s340
        %s342 = smul.u32 8, %s23
        %p344 = scmp.eq.s32.totalorder %s24, 0
        %p345 = scmp.eq.s32.totalorder %s25, 0
        %p346 = pnand %p344, %p345
        %p347 = pneg %p346
        // Predicated region
        $region41: #{tpu_custom_call.1} parent=35 // pred_check
          _
        $region42: #{tpu_custom_call.1} parent=35 // pred_check_branch
          %349 = sbr.rel (%p346) target = $region44
        $region43: #{tpu_custom_call.1} parent=35 // pred_region
          %vm350 = vcmask 7168
          %351 = vst.msk [vmem:[#allocation2] sm:$0xff] %vm350, 0.0
          %352 = vst.msk [vmem:[#allocation2 + $0x8] sm:$0xff] %vm350, 0.0
          %353 = vst.msk [vmem:[#allocation2 + $0x10] sm:$0xff] %vm350, 0.0
          %354 = vst.msk [vmem:[#allocation2 + $0x18] sm:$0xff] %vm350, 0.0
          %355 = vst.msk [vmem:[#allocation2 + $0x20] sm:$0xff] %vm350, 0.0
          %356 = vst.msk [vmem:[#allocation2 + $0x28] sm:$0xff] %vm350, 0.0
          %357 = vst.msk [vmem:[#allocation2 + $0x30] sm:$0xff] %vm350, 0.0
          %358 = vst.msk [vmem:[#allocation2 + $0x38] sm:$0xff] %vm350, 0.0
          %359 = vst.msk [vmem:[#allocation3] sm:$0xff] %vm350, 0.0
          %360 = vst.msk [vmem:[#allocation3 + $0x8] sm:$0xff] %vm350, 0.0
          %361 = vst.msk [vmem:[#allocation3 + $0x10] sm:$0xff] %vm350, 0.0
          %362 = vst.msk [vmem:[#allocation3 + $0x18] sm:$0xff] %vm350, 0.0
          %363 = vst.msk [vmem:[#allocation3 + $0x20] sm:$0xff] %vm350, 0.0
          %364 = vst.msk [vmem:[#allocation3 + $0x28] sm:$0xff] %vm350, 0.0
          %365 = vst.msk [vmem:[#allocation3 + $0x30] sm:$0xff] %vm350, 0.0
          %366 = vst.msk [vmem:[#allocation3 + $0x38] sm:$0xff] %vm350, 0.0
          %367 = vst.msk [vmem:[#allocation4] sm:$0xff] %vm350, 0.0
          %368 = vst.msk [vmem:[#allocation4 + $0x8] sm:$0xff] %vm350, 0.0
          %369 = vst.msk [vmem:[#allocation4 + $0x10] sm:$0xff] %vm350, 0.0
          %370 = vst.msk [vmem:[#allocation4 + $0x18] sm:$0xff] %vm350, 0.0
          %371 = vst.msk [vmem:[#allocation4 + $0x20] sm:$0xff] %vm350, 0.0
          %372 = vst.msk [vmem:[#allocation4 + $0x28] sm:$0xff] %vm350, 0.0
          %373 = vst.msk [vmem:[#allocation4 + $0x30] sm:$0xff] %vm350, 0.0
          %374 = vst.msk [vmem:[#allocation4 + $0x38] sm:$0xff] %vm350, 0.0
        $region44: #{tpu_custom_call.1} parent=35 // pred_fallthru
          _
        // Predicated region
        $region45: #{tpu_custom_call.1} parent=35 // pred_check
          %p375 = pneg %p344
        $region46: #{tpu_custom_call.1} parent=35 // pred_check_branch
          %377 = sbr.rel (%p375) target = $region48
        $region47: #{tpu_custom_call.1} parent=35 // pred_region
          %v378 = vld [vmem:[%s313] sm:$0xf]
          %v379 = vld [vmem:[%s313 + $0x4] sm:$0xf]
          %v380 = vld [vmem:[%s313 + $0x8] sm:$0xf]
          %v381 = vld [vmem:[%s313 + $0xc] sm:$0xf]
          %v382 = vld [vmem:[%s313 + $0x10] sm:$0xf]
          %v383 = vld [vmem:[%s313 + $0x14] sm:$0xf]
          %v384 = vld [vmem:[%s313 + $0x18] sm:$0xf]
          %v385 = vld [vmem:[%s313 + $0x1c] sm:$0xf]
          %v386 = vld [vmem:[%s320] sm:$0xf]
          %v387 = vld [vmem:[%s320 + $0x4] sm:$0xf]
          %v388 = vld [vmem:[%s320 + $0x8] sm:$0xf]
          %v389 = vld [vmem:[%s320 + $0xc] sm:$0xf]
          %v398 = vunpack.c.l.b16 %v378
          %v399 = vunpack.c.l.b16 %v379
          %v400 = vunpack.c.l.b16 %v380
          %v401 = vunpack.c.l.b16 %v381
          %v402 = vunpack.c.l.b16 %v382
          %v403 = vunpack.c.l.b16 %v383
          %v404 = vunpack.c.l.b16 %v384
          %v405 = vunpack.c.l.b16 %v385
          %v406 = vpack.c.b16 %v399, %v398
          %v407 = vpack.c.b16 %v401, %v400
          %v408 = vpack.c.b16 %v403, %v402
          %v409 = vpack.c.b16 %v405, %v404
          %v414 = vunpack.c.l.b16 %v386
          %v415 = vunpack.c.l.b16 %v387
          %v416 = vunpack.c.l.b16 %v388
          %v417 = vunpack.c.l.b16 %v389
          %v418 = vpack.c.b16 %v415, %v414
          %v419 = vpack.c.b16 %v417, %v416
          %vm422 = vcmask 261120
          %v424 = vsel %vm422, %v406, 0
          %v427 = vsel %vm422, %v407, 0
          %v430 = vsel %vm422, %v408, 0
          %v433 = vsel %vm422, %v409, 0
          %435 = vmatprep.subr.bf16.mxu0 0
          %436 = vmatpush1.bf16.msra.mxu0 0
          %437 = vmatprep.subr.bf16.mxu0 0
          %438 = vmatpush1.bf16.msra.mxu0 0
          %439 = vmatprep.subr.bf16.mxu0 0
          %440 = vmatpush1.bf16.msra.mxu0 0
          %441 = vmatprep.subr.bf16.mxu0 0
          %442 = vmatpush1.bf16.msra.mxu0 0
          %443 = vmatprep.subr.bf16.mxu0 0
          %444 = vmatpush1.bf16.msra.mxu0 0
          %445 = vmatprep.subr.bf16.mxu0 0
          %446 = vmatpush1.bf16.msra.mxu0 0
          %447 = vmatprep.subr.bf16.mxu0 0
          %448 = vmatpush1.bf16.msra.mxu0 %v419
          %449 = vmatprep.subr.bf16.mxu0 0
          %450 = vmatpush1.bf16.msra.mxu0 %v418
          %451 = vmatprep.subr.bf16.mxu0 0
          %452 = vmatpush2.bf16.msra.mxu0 0
          %453 = vmatprep.subr.bf16.mxu0 0
          %454 = vmatpush2.bf16.msra.mxu0 0
          %455 = vmatprep.subr.bf16.mxu0 0
          %456 = vmatpush2.bf16.msra.mxu0 0
          %457 = vmatprep.subr.bf16.mxu0 0
          %458 = vmatpush2.bf16.msra.mxu0 0
          %459 = vmatprep.subr.bf16.mxu0 0
          %460 = vmatpush2.bf16.msra.mxu0 0
          %461 = vmatprep.subr.bf16.mxu0 0
          %462 = vmatpush2.bf16.msra.mxu0 0
          %463 = vmatprep.subr.bf16.mxu0 0
          %464 = vmatpush2.bf16.msra.mxu0 0
          %465 = vmatprep.subr.bf16.mxu0 0
          %466 = vmatpush2.bf16.msra.mxu0 0
          %467 = vmatprep.mubr.bf16.mxu0 0
          %468 = vmatmul.mubr.bf16.gmra.mxu0 %v424
          %v469 = vpop.f32.mrf.mxu0
          %v470 = vadd.f32 0.0, %v469
          %v471 = vpop.f32.mrf.mxu0
          %v472 = vpop.f32.mrf.mxu0
          %v473 = vadd.f32 0.0, %v472
          %v474 = vpop.f32.mrf.mxu0
          %475 = vmatprep.mubr.bf16.mxu0 0
          %476 = vmatmul.mubr.bf16.gmra.mxu0 %v427
          %v477 = vpop.f32.mrf.mxu0
          %v478 = vadd.f32 0.0, %v477
          %v479 = vpop.f32.mrf.mxu0
          %v480 = vpop.f32.mrf.mxu0
          %v481 = vadd.f32 0.0, %v480
          %v482 = vpop.f32.mrf.mxu0
          %483 = vmatprep.mubr.bf16.mxu0 0
          %484 = vmatmul.mubr.bf16.gmra.mxu0 %v430
          %v485 = vpop.f32.mrf.mxu0
          %v486 = vadd.f32 0.0, %v485
          %v487 = vpop.f32.mrf.mxu0
          %v488 = vpop.f32.mrf.mxu0
          %v489 = vadd.f32 0.0, %v488
          %v490 = vpop.f32.mrf.mxu0
          %491 = vmatprep.mubr.bf16.mxu0 0
          %492 = vmatmul.mubr.bf16.gmra.mxu0 %v433
          %v493 = vpop.f32.mrf.mxu0
          %v494 = vadd.f32 0.0, %v493
          %v495 = vpop.f32.mrf.mxu0
          %v496 = vpop.f32.mrf.mxu0
          %v497 = vadd.f32 0.0, %v496
          %v498 = vpop.f32.mrf.mxu0
          %499 = vdwg.mxu0
          %v500 = vmul.f32 %v470, 1.442695
          %v501 = vpow.pop %v500
          %v502 = vmul.f32 %v473, 1.442695
          %v503 = vpow.pop %v502
          %v504 = vmul.f32 %v478, 1.442695
          %v505 = vpow.pop %v504
          %v506 = vmul.f32 %v481, 1.442695
          %v507 = vpow.pop %v506
          %v508 = vmul.f32 %v486, 1.442695
          %v509 = vpow.pop %v508
          %v510 = vmul.f32 %v489, 1.442695
          %v511 = vpow.pop %v510
          %v512 = vmul.f32 %v494, 1.442695
          %v513 = vpow.pop %v512
          %v514 = vmul.f32 %v497, 1.442695
          %v515 = vpow.pop %v514
          %s516 = smul.u32 %s25, 64
          %s517 = scalar_lea.vmem [#allocation5], %s516
          %518 = vst [vmem:[%s517] sm:$0xff] %v501
          %519 = vst [vmem:[%s517 + $0x8] sm:$0xff] %v503
          %520 = vst [vmem:[%s517 + $0x10] sm:$0xff] %v505
          %521 = vst [vmem:[%s517 + $0x18] sm:$0xff] %v507
          %522 = vst [vmem:[%s517 + $0x20] sm:$0xff] %v509
          %523 = vst [vmem:[%s517 + $0x28] sm:$0xff] %v511
          %524 = vst [vmem:[%s517 + $0x30] sm:$0xff] %v513
          %525 = vst [vmem:[%s517 + $0x38] sm:$0xff] %v515
          %v526 = vld [vmem:[%s264] sm:$0xf]
          %v527 = vld [vmem:[%s264 + $0x4] sm:$0xf]
          %v528 = vld [vmem:[%s264 + $0x8] sm:$0xf]
          %v529 = vld [vmem:[%s264 + $0xc] sm:$0xf]
          %v530 = vld [vmem:[%s264 + $0x10] sm:$0xf]
          %v531 = vld [vmem:[%s264 + $0x14] sm:$0xf]
          %v532 = vld [vmem:[%s264 + $0x18] sm:$0xf]
          %v533 = vld [vmem:[%s264 + $0x1c] sm:$0xf]
          %v534 = vunpack.c.l.bf16 %v526
          %v535 = vunpack.c.l.bf16 %v527
          %v536 = vunpack.c.l.bf16 %v528
          %v537 = vunpack.c.l.bf16 %v529
          %v538 = vunpack.c.l.bf16 %v530
          %v539 = vunpack.c.l.bf16 %v531
          %v540 = vunpack.c.l.bf16 %v532
          %v541 = vunpack.c.l.bf16 %v533
          %v542 = vld [vmem:[#allocation2] sm:$0xff]
          %v543 = vld [vmem:[#allocation2 + $0x8] sm:$0xff]
          %v544 = vld [vmem:[#allocation2 + $0x10] sm:$0xff]
          %v545 = vld [vmem:[#allocation2 + $0x18] sm:$0xff]
          %v546 = vld [vmem:[#allocation2 + $0x20] sm:$0xff]
          %v547 = vld [vmem:[#allocation2 + $0x28] sm:$0xff]
          %v548 = vld [vmem:[#allocation2 + $0x30] sm:$0xff]
          %v549 = vld [vmem:[#allocation2 + $0x38] sm:$0xff]
          %v550 = vmul.f32 %v501, %v534
          %v551 = vmul.f32 %v503, %v535
          %v552 = vmul.f32 %v505, %v536
          %v553 = vmul.f32 %v507, %v537
          %v554 = vmul.f32 %v509, %v538
          %v555 = vmul.f32 %v511, %v539
          %v556 = vmul.f32 %v513, %v540
          %v557 = vmul.f32 %v515, %v541
          %558 = vadd.xlane.f32.xlu0 %v550
          %v559 = vpop.xlane.xlu0 %558
          %560 = vadd.xlane.f32.xlu0 %v551
          %v561 = vpop.xlane.xlu0 %560
          %562 = vadd.xlane.f32.xlu0 %v552
          %v563 = vpop.xlane.xlu0 %562
          %564 = vadd.xlane.f32.xlu0 %v553
          %v565 = vpop.xlane.xlu0 %564
          %566 = vadd.xlane.f32.xlu0 %v554
          %v567 = vpop.xlane.xlu0 %566
          %568 = vadd.xlane.f32.xlu0 %v555
          %v569 = vpop.xlane.xlu0 %568
          %570 = vadd.xlane.f32.xlu0 %v556
          %v571 = vpop.xlane.xlu0 %570
          %572 = vadd.xlane.f32.xlu0 %v557
          %v573 = vpop.xlane.xlu0 %572
          %v574 = vadd.f32 %v542, %v559
          %v575 = vadd.f32 %v543, %v561
          %v576 = vadd.f32 %v544, %v563
          %v577 = vadd.f32 %v545, %v565
          %v578 = vadd.f32 %v546, %v567
          %v579 = vadd.f32 %v547, %v569
          %v580 = vadd.f32 %v548, %v571
          %v581 = vadd.f32 %v549, %v573
          %vm582 = vcmask 7168
          %583 = vst.msk [vmem:[#allocation2] sm:$0xff] %vm582, %v574
          %584 = vst.msk [vmem:[#allocation2 + $0x8] sm:$0xff] %vm582, %v575
          %585 = vst.msk [vmem:[#allocation2 + $0x10] sm:$0xff] %vm582, %v576
          %586 = vst.msk [vmem:[#allocation2 + $0x18] sm:$0xff] %vm582, %v577
          %587 = vst.msk [vmem:[#allocation2 + $0x20] sm:$0xff] %vm582, %v578
          %588 = vst.msk [vmem:[#allocation2 + $0x28] sm:$0xff] %vm582, %v579
          %589 = vst.msk [vmem:[#allocation2 + $0x30] sm:$0xff] %vm582, %v580
          %590 = vst.msk [vmem:[#allocation2 + $0x38] sm:$0xff] %vm582, %v581
        $region48: #{tpu_custom_call.1} parent=35 // pred_fallthru
          _
        %p591 = scmp.eq.s32.totalorder %s24, 1
        // Predicated region
        $region49: #{tpu_custom_call.1} parent=35 // pred_check
          %p592 = pneg %p591
        $region50: #{tpu_custom_call.1} parent=35 // pred_check_branch
          %594 = sbr.rel (%p592) target = $region52
        $region51: #{tpu_custom_call.1} parent=35 // pred_region
          %s595 = smul.u32 %s25, 64
          %s596 = scalar_lea.vmem [#allocation5], %s595
          %v597 = vld [vmem:[%s596] sm:$0xff]
          %v598 = vld [vmem:[%s596 + $0x8] sm:$0xff]
          %v599 = vld [vmem:[%s596 + $0x10] sm:$0xff]
          %v600 = vld [vmem:[%s596 + $0x18] sm:$0xff]
          %v601 = vld [vmem:[%s596 + $0x20] sm:$0xff]
          %v602 = vld [vmem:[%s596 + $0x28] sm:$0xff]
          %v603 = vld [vmem:[%s596 + $0x30] sm:$0xff]
          %v604 = vld [vmem:[%s596 + $0x38] sm:$0xff]
          %v605 = vld [vmem:[%s331] sm:$0xf]
          %v606 = vld [vmem:[%s331 + $0x4] sm:$0xf]
          %v607 = vld [vmem:[%s331 + $0x8] sm:$0xf]
          %v608 = vld [vmem:[%s331 + $0xc] sm:$0xf]
          %v609 = vld [vmem:[%s331 + $0x10] sm:$0xf]
          %v610 = vld [vmem:[%s331 + $0x14] sm:$0xf]
          %v611 = vld [vmem:[%s331 + $0x18] sm:$0xf]
          %v612 = vld [vmem:[%s331 + $0x1c] sm:$0xf]
          %v613 = vunpack.c.l.bf16 %v605
          %v614 = vunpack.c.l.bf16 %v606
          %v615 = vunpack.c.l.bf16 %v607
          %v616 = vunpack.c.l.bf16 %v608
          %v617 = vunpack.c.l.bf16 %v609
          %v618 = vunpack.c.l.bf16 %v610
          %v619 = vunpack.c.l.bf16 %v611
          %v620 = vunpack.c.l.bf16 %v612
          %v621 = vld [vmem:[#allocation2] sm:$0xff]
          %v622 = vld [vmem:[#allocation2 + $0x8] sm:$0xff]
          %v623 = vld [vmem:[#allocation2 + $0x10] sm:$0xff]
          %v624 = vld [vmem:[#allocation2 + $0x18] sm:$0xff]
          %v625 = vld [vmem:[#allocation2 + $0x20] sm:$0xff]
          %v626 = vld [vmem:[#allocation2 + $0x28] sm:$0xff]
          %v627 = vld [vmem:[#allocation2 + $0x30] sm:$0xff]
          %v628 = vld [vmem:[#allocation2 + $0x38] sm:$0xff]
          %v629 = vrcp.pop %v621
          %v630 = vmul.f32 1.0, %v629
          %v631 = vrcp.pop %v622
          %v632 = vmul.f32 1.0, %v631
          %v633 = vrcp.pop %v623
          %v634 = vmul.f32 1.0, %v633
          %v635 = vrcp.pop %v624
          %v636 = vmul.f32 1.0, %v635
          %v637 = vrcp.pop %v625
          %v638 = vmul.f32 1.0, %v637
          %v639 = vrcp.pop %v626
          %v640 = vmul.f32 1.0, %v639
          %v641 = vrcp.pop %v627
          %v642 = vmul.f32 1.0, %v641
          %v643 = vrcp.pop %v628
          %v644 = vmul.f32 1.0, %v643
          %646 = vset.pattern.permute.xlu0 0
          %647 = vperm.xlu0 %646, %v630
          %v648 = vpop.permute.xlu0 %647
          %651 = vset.pattern.permute.xlu0 0
          %652 = vperm.xlu0 %651, %v632
          %v653 = vpop.permute.xlu0 %652
          %656 = vset.pattern.permute.xlu0 0
          %657 = vperm.xlu0 %656, %v634
          %v658 = vpop.permute.xlu0 %657
          %661 = vset.pattern.permute.xlu0 0
          %662 = vperm.xlu0 %661, %v636
          %v663 = vpop.permute.xlu0 %662
          %666 = vset.pattern.permute.xlu0 0
          %667 = vperm.xlu0 %666, %v638
          %v668 = vpop.permute.xlu0 %667
          %671 = vset.pattern.permute.xlu0 0
          %672 = vperm.xlu0 %671, %v640
          %v673 = vpop.permute.xlu0 %672
          %676 = vset.pattern.permute.xlu0 0
          %677 = vperm.xlu0 %676, %v642
          %v678 = vpop.permute.xlu0 %677
          %681 = vset.pattern.permute.xlu0 0
          %682 = vperm.xlu0 %681, %v644
          %v683 = vpop.permute.xlu0 %682
          %v685 = vmul.f32 %v597, %v648
          %v686 = vmul.f32 %v598, %v653
          %v687 = vmul.f32 %v599, %v658
          %v688 = vmul.f32 %v600, %v663
          %v689 = vmul.f32 %v601, %v668
          %v690 = vmul.f32 %v602, %v673
          %v691 = vmul.f32 %v603, %v678
          %v692 = vmul.f32 %v604, %v683
          %v693 = vadd.f32 %v685, 1e-06
          %v694 = vadd.f32 %v686, 1e-06
          %v695 = vadd.f32 %v687, 1e-06
          %v696 = vadd.f32 %v688, 1e-06
          %v697 = vadd.f32 %v689, 1e-06
          %v698 = vadd.f32 %v690, 1e-06
          %v699 = vadd.f32 %v691, 1e-06
          %v700 = vadd.f32 %v692, 1e-06
          %v701 = vlog2.pop %v693
          %v702 = vmul.f32 %v701, 0.6931472
          %v703 = vlog2.pop %v694
          %v704 = vmul.f32 %v703, 0.6931472
          %v705 = vlog2.pop %v695
          %v706 = vmul.f32 %v705, 0.6931472
          %v707 = vlog2.pop %v696
          %v708 = vmul.f32 %v707, 0.6931472
          %v709 = vlog2.pop %v697
          %v710 = vmul.f32 %v709, 0.6931472
          %v711 = vlog2.pop %v698
          %v712 = vmul.f32 %v711, 0.6931472
          %v713 = vlog2.pop %v699
          %v714 = vmul.f32 %v713, 0.6931472
          %v715 = vlog2.pop %v700
          %v716 = vmul.f32 %v715, 0.6931472
          %v717 = vsub.f32 0.0, %v702
          %v718 = vsub.f32 0.0, %v704
          %v719 = vsub.f32 0.0, %v706
          %v720 = vsub.f32 0.0, %v708
          %v721 = vsub.f32 0.0, %v710
          %v722 = vsub.f32 0.0, %v712
          %v723 = vsub.f32 0.0, %v714
          %v724 = vsub.f32 0.0, %v716
          %v725 = vld [vmem:[#allocation3] sm:$0xff]
          %v726 = vld [vmem:[#allocation3 + $0x8] sm:$0xff]
          %v727 = vld [vmem:[#allocation3 + $0x10] sm:$0xff]
          %v728 = vld [vmem:[#allocation3 + $0x18] sm:$0xff]
          %v729 = vld [vmem:[#allocation3 + $0x20] sm:$0xff]
          %v730 = vld [vmem:[#allocation3 + $0x28] sm:$0xff]
          %v731 = vld [vmem:[#allocation3 + $0x30] sm:$0xff]
          %v732 = vld [vmem:[#allocation3 + $0x38] sm:$0xff]
          %v733 = vmul.f32 %v717, %v613
          %v734 = vmul.f32 %v718, %v614
          %v735 = vmul.f32 %v719, %v615
          %v736 = vmul.f32 %v720, %v616
          %v737 = vmul.f32 %v721, %v617
          %v738 = vmul.f32 %v722, %v618
          %v739 = vmul.f32 %v723, %v619
          %v740 = vmul.f32 %v724, %v620
          %741 = vadd.xlane.f32.xlu0 %v733
          %v742 = vpop.xlane.xlu0 %741
          %743 = vadd.xlane.f32.xlu0 %v734
          %v744 = vpop.xlane.xlu0 %743
          %745 = vadd.xlane.f32.xlu0 %v735
          %v746 = vpop.xlane.xlu0 %745
          %747 = vadd.xlane.f32.xlu0 %v736
          %v748 = vpop.xlane.xlu0 %747
          %749 = vadd.xlane.f32.xlu0 %v737
          %v750 = vpop.xlane.xlu0 %749
          %751 = vadd.xlane.f32.xlu0 %v738
          %v752 = vpop.xlane.xlu0 %751
          %753 = vadd.xlane.f32.xlu0 %v739
          %v754 = vpop.xlane.xlu0 %753
          %755 = vadd.xlane.f32.xlu0 %v740
          %v756 = vpop.xlane.xlu0 %755
          %v757 = vadd.f32 %v725, %v742
          %v758 = vadd.f32 %v726, %v744
          %v759 = vadd.f32 %v727, %v746
          %v760 = vadd.f32 %v728, %v748
          %v761 = vadd.f32 %v729, %v750
          %v762 = vadd.f32 %v730, %v752
          %v763 = vadd.f32 %v731, %v754
          %v764 = vadd.f32 %v732, %v756
          %vm765 = vcmask 7168
          %766 = vst.msk [vmem:[#allocation3] sm:$0xff] %vm765, %v757
          %767 = vst.msk [vmem:[#allocation3 + $0x8] sm:$0xff] %vm765, %v758
          %768 = vst.msk [vmem:[#allocation3 + $0x10] sm:$0xff] %vm765, %v759
          %769 = vst.msk [vmem:[#allocation3 + $0x18] sm:$0xff] %vm765, %v760
          %770 = vst.msk [vmem:[#allocation3 + $0x20] sm:$0xff] %vm765, %v761
          %771 = vst.msk [vmem:[#allocation3 + $0x28] sm:$0xff] %vm765, %v762
          %772 = vst.msk [vmem:[#allocation3 + $0x30] sm:$0xff] %vm765, %v763
          %773 = vst.msk [vmem:[#allocation3 + $0x38] sm:$0xff] %vm765, %v764
          %v774 = vld [vmem:[#allocation4] sm:$0xff]
          %v775 = vld [vmem:[#allocation4 + $0x8] sm:$0xff]
          %v776 = vld [vmem:[#allocation4 + $0x10] sm:$0xff]
          %v777 = vld [vmem:[#allocation4 + $0x18] sm:$0xff]
          %v778 = vld [vmem:[#allocation4 + $0x20] sm:$0xff]
          %v779 = vld [vmem:[#allocation4 + $0x28] sm:$0xff]
          %v780 = vld [vmem:[#allocation4 + $0x30] sm:$0xff]
          %v781 = vld [vmem:[#allocation4 + $0x38] sm:$0xff]
          %782 = vadd.xlane.f32.xlu0 %v613
          %v783 = vpop.xlane.xlu0 %782
          %784 = vadd.xlane.f32.xlu0 %v614
          %v785 = vpop.xlane.xlu0 %784
          %786 = vadd.xlane.f32.xlu0 %v615
          %v787 = vpop.xlane.xlu0 %786
          %788 = vadd.xlane.f32.xlu0 %v616
          %v789 = vpop.xlane.xlu0 %788
          %790 = vadd.xlane.f32.xlu0 %v617
          %v791 = vpop.xlane.xlu0 %790
          %792 = vadd.xlane.f32.xlu0 %v618
          %v793 = vpop.xlane.xlu0 %792
          %794 = vadd.xlane.f32.xlu0 %v619
          %v795 = vpop.xlane.xlu0 %794
          %796 = vadd.xlane.f32.xlu0 %v620
          %v797 = vpop.xlane.xlu0 %796
          %v798 = vadd.f32 %v774, %v783
          %v799 = vadd.f32 %v775, %v785
          %v800 = vadd.f32 %v776, %v787
          %v801 = vadd.f32 %v777, %v789
          %v802 = vadd.f32 %v778, %v791
          %v803 = vadd.f32 %v779, %v793
          %v804 = vadd.f32 %v780, %v795
          %v805 = vadd.f32 %v781, %v797
          %806 = vst.msk [vmem:[#allocation4] sm:$0xff] %vm765, %v798
          %807 = vst.msk [vmem:[#allocation4 + $0x8] sm:$0xff] %vm765, %v799
          %808 = vst.msk [vmem:[#allocation4 + $0x10] sm:$0xff] %vm765, %v800
          %809 = vst.msk [vmem:[#allocation4 + $0x18] sm:$0xff] %vm765, %v801
          %810 = vst.msk [vmem:[#allocation4 + $0x20] sm:$0xff] %vm765, %v802
          %811 = vst.msk [vmem:[#allocation4 + $0x28] sm:$0xff] %vm765, %v803
          %812 = vst.msk [vmem:[#allocation4 + $0x30] sm:$0xff] %vm765, %v804
          %813 = vst.msk [vmem:[#allocation4 + $0x38] sm:$0xff] %vm765, %v805
        $region52: #{tpu_custom_call.1} parent=35 // pred_fallthru
          _
        %p814 = pnand %p591, %p345
        %p815 = pneg %p814
        // Predicated region
        $region53: #{tpu_custom_call.1} parent=35 // pred_check
          _
        $region54: #{tpu_custom_call.1} parent=35 // pred_check_branch
          %817 = sbr.rel (%p814) target = $region56
        $region55: #{tpu_custom_call.1} parent=35 // pred_region
          %v818 = vld [vmem:[#allocation4] sm:$0xff]
          %v819 = vld [vmem:[#allocation4 + $0x8] sm:$0xff]
          %v820 = vld [vmem:[#allocation4 + $0x10] sm:$0xff]
          %v821 = vld [vmem:[#allocation4 + $0x18] sm:$0xff]
          %v822 = vld [vmem:[#allocation4 + $0x20] sm:$0xff]
          %v823 = vld [vmem:[#allocation4 + $0x28] sm:$0xff]
          %v824 = vld [vmem:[#allocation4 + $0x30] sm:$0xff]
          %v825 = vld [vmem:[#allocation4 + $0x38] sm:$0xff]
          %vm826 = vcmp.eq.f32.partialorder %v818, 0.0
          %vm827 = vcmp.eq.f32.partialorder %v819, 0.0
          %vm828 = vcmp.eq.f32.partialorder %v820, 0.0
          %vm829 = vcmp.eq.f32.partialorder %v821, 0.0
          %vm830 = vcmp.eq.f32.partialorder %v822, 0.0
          %vm831 = vcmp.eq.f32.partialorder %v823, 0.0
          %vm832 = vcmp.eq.f32.partialorder %v824, 0.0
          %vm833 = vcmp.eq.f32.partialorder %v825, 0.0
          %v834 = vsel %vm826, 1.0, %v818
          %v835 = vsel %vm827, 1.0, %v819
          %v836 = vsel %vm828, 1.0, %v820
          %v837 = vsel %vm829, 1.0, %v821
          %v838 = vsel %vm830, 1.0, %v822
          %v839 = vsel %vm831, 1.0, %v823
          %v840 = vsel %vm832, 1.0, %v824
          %v841 = vsel %vm833, 1.0, %v825
          %v842 = vld [vmem:[#allocation3] sm:$0xff]
          %v843 = vld [vmem:[#allocation3 + $0x8] sm:$0xff]
          %v844 = vld [vmem:[#allocation3 + $0x10] sm:$0xff]
          %v845 = vld [vmem:[#allocation3 + $0x18] sm:$0xff]
          %v846 = vld [vmem:[#allocation3 + $0x20] sm:$0xff]
          %v847 = vld [vmem:[#allocation3 + $0x28] sm:$0xff]
          %v848 = vld [vmem:[#allocation3 + $0x30] sm:$0xff]
          %v849 = vld [vmem:[#allocation3 + $0x38] sm:$0xff]
          %v850 = vrcp.pop %v834
          %v851 = vmul.f32 %v842, %v850
          %v852 = vrcp.pop %v835
          %v853 = vmul.f32 %v843, %v852
          %v854 = vrcp.pop %v836
          %v855 = vmul.f32 %v844, %v854
          %v856 = vrcp.pop %v837
          %v857 = vmul.f32 %v845, %v856
          %v858 = vrcp.pop %v838
          %v859 = vmul.f32 %v846, %v858
          %v860 = vrcp.pop %v839
          %v861 = vmul.f32 %v847, %v860
          %v862 = vrcp.pop %v840
          %v863 = vmul.f32 %v848, %v862
          %v864 = vrcp.pop %v841
          %v865 = vmul.f32 %v849, %v864
          %s866 = smul.u32 %s23, 64
          %v867 = vlaneseq
          %v868 = vshrl.u32 %v867, 7
          %v869 = vadd.s32 %v868, 8
          %v870 = vadd.s32 %v868, 16
          %v871 = vadd.s32 %v868, 24
          %v872 = vadd.s32 %v868, 32
          %v873 = vadd.s32 %v868, 40
          %v874 = vadd.s32 %v868, 48
          %v875 = vadd.s32 %v868, 56
          %v876 = vstv %s866
          %v877 = vadd.s32 %v876, %v868
          %v878 = vadd.s32 %v876, %v869
          %v879 = vadd.s32 %v876, %v870
          %v880 = vadd.s32 %v876, %v871
          %v881 = vadd.s32 %v876, %v872
          %v882 = vadd.s32 %v876, %v873
          %v883 = vadd.s32 %v876, %v874
          %v884 = vadd.s32 %v876, %v875
          %vm885 = vcmp.lt.s32.totalorder %v877, 8
          %vm886 = vcmp.lt.s32.totalorder %v878, 8
          %vm887 = vcmp.lt.s32.totalorder %v879, 8
          %vm888 = vcmp.lt.s32.totalorder %v880, 8
          %vm889 = vcmp.lt.s32.totalorder %v881, 8
          %vm890 = vcmp.lt.s32.totalorder %v882, 8
          %vm891 = vcmp.lt.s32.totalorder %v883, 8
          %vm892 = vcmp.lt.s32.totalorder %v884, 8
          %v893 = vsel %vm885, %v851, 0.0
          %v894 = vsel %vm886, %v853, 0.0
          %v895 = vsel %vm887, %v855, 0.0
          %v896 = vsel %vm888, %v857, 0.0
          %v897 = vsel %vm889, %v859, 0.0
          %v898 = vsel %vm890, %v861, 0.0
          %v899 = vsel %vm891, %v863, 0.0
          %v900 = vsel %vm892, %v865, 0.0
          %vm901 = vcmask 7168
          %902 = vst.msk [vmem:[%s341] sm:$0xff] %vm901, %v893
          %903 = vst.msk [vmem:[%s341 + $0x8] sm:$0xff] %vm901, %v894
          %904 = vst.msk [vmem:[%s341 + $0x10] sm:$0xff] %vm901, %v895
          %905 = vst.msk [vmem:[%s341 + $0x18] sm:$0xff] %vm901, %v896
          %906 = vst.msk [vmem:[%s341 + $0x20] sm:$0xff] %vm901, %v897
          %907 = vst.msk [vmem:[%s341 + $0x28] sm:$0xff] %vm901, %v898
          %908 = vst.msk [vmem:[%s341 + $0x30] sm:$0xff] %vm901, %v899
          %909 = vst.msk [vmem:[%s341 + $0x38] sm:$0xff] %vm901, %v900
        $region56: #{tpu_custom_call.1} parent=35 // pred_fallthru
          _
        %s910 = smul.u32 8, %s23
        %p911 = scmp.lt.s32.totalorder %s910, 15
        %s912 = scalar_select %p911, %s910, 15
        %s913 = smul.addr %s912, 8
        %s914 = scalar_lea.vmem %s4, %s913
        // Predicated region
        $region57: #{tpu_custom_call.1} parent=35 // pred_check
          %p915 = pneg %p173
        $region58: #{tpu_custom_call.1} parent=35 // pred_check_branch
          %917 = sbr.rel (%p915) target = $region60
        $region59: #{tpu_custom_call.1} parent=35 // pred_region
          %s918 = smul.u32 8, %s23
        $region60: #{tpu_custom_call.1} parent=35 // pred_fallthru
          _
      $region36: #{tpu_custom_call.1} parent=5 // pred_fallthru
        _
      %p919 = scmp.le.s32.totalorder 2, %s13
      // Predicated region
      $region61: #{tpu_custom_call.1} parent=5 // pred_check
        %p920 = pneg %p919
      $region62: #{tpu_custom_call.1} parent=5 // pred_check_branch
        %922 = sbr.rel (%p920) target = $region64
      $region63: #{tpu_custom_call.1} parent=5 // pred_region
        %s923 = ssub.s32 %s13, 2
        // Predicated region
        $region65: #{tpu_custom_call.1} parent=63 // pred_check
          %p924 = pneg %p179
        $region66: #{tpu_custom_call.1} parent=63 // pred_check_branch
          %926 = sbr.rel (%p924) target = $region68
        $region67: #{tpu_custom_call.1} parent=63 // pred_region
          %s927 = smul.u32 8, %s26
          %p928 = scmp.lt.s32.totalorder %s927, 15
          %s929 = scalar_select %p928, %s927, 15
          %s930 = smul.addr %s929, 8
          %s931 = scalar_lea.vmem %s4, %s930
        $region68: #{tpu_custom_call.1} parent=63 // pred_fallthru
          _
      $region64: #{tpu_custom_call.1} parent=5 // pred_fallthru
        _
    $region6: #{tpu_custom_call.1} parent=1 // loop_footer
      %s17 = sadd.s32 1, %s13
    $region7: #{tpu_custom_call.1} parent=1 // loop_footer_branch
      %12 = sbr.rel target = $region3
    $region8: #{tpu_custom_call.1} parent=1 // loop_exit
      _
    %932 = vsyncpa [#allocation7], 1
    %s933 = scalar_lea.sflag [#allocation7], 1
    %934 = vsyncpa %s933, 1

</llo_original>
